<compile_context>
chip_gen: v7x
topology: tpu7x:2x2x1
jax: 0.10.0
libtpu: 0.0.40
codegen_flags: <defaults>
</compile_context>

<pallas_src>
import functools
import math

import jax
import jax.numpy as jnp
from jax.experimental import pallas as pl
from jax.experimental.pallas import tpu as pltpu


_HALF_LOG_2PI = 0.5 * math.log(2.0 * math.pi)


def _round_up(x, m):
    return ((x + m - 1) // m) * m


def actor_kernel(noise_ref, x_ref, w_ref, p_ref, eps_ref, act_ref, lp_ref, *,
                 input_dim, ip, wp, output_dim):
    """Fused MLP + tanh-squashed Gaussian sampling + log-prob.

    noise_ref : SMEM (1,) int32  -- 1 = train (add noise), 0 = eval
    x_ref     : (bb, input_dim)            observation block (natural width)
    w_ref     : (ip + 2*wp, wp)            packed [w1; w2; w3] (zero padded)
    p_ref     : (8, wp) rows = [b1, b2, b3, scale, bias, std, -logstd-0.5log2pi, 0]
    eps_ref   : (bb, output_dim)           N(0,1) noise (natural width)
    act_ref   : (bb, output_dim)           action output
    lp_ref    : (bb, 1)                    log_prob output
    """
    noise = noise_ref[0].astype(jnp.float32)          # 1.0 train / 0.0 eval

    x = x_ref[...]
    if ip > input_dim:                                 # static; usually a no-op
        x = jnp.pad(x, ((0, 0), (0, ip - input_dim)))

    # Static sub-slices of the packed weight slab (8-aligned row offsets).
    w1 = w_ref[0:ip, :]
    w2 = w_ref[ip:ip + wp, :]
    w3 = w_ref[ip + wp:ip + 2 * wp, :]

    b1 = p_ref[0:1, :]
    b2 = p_ref[1:2, :]
    b3 = p_ref[2:3, :]

    # actor_mean: Linear -> ReLU -> Linear -> ReLU -> Linear -> Tanh  (wide, on MXU)
    h1 = jnp.maximum(jnp.dot(x, w1, preferred_element_type=jnp.float32) + b1, 0.0)
    h2 = jnp.maximum(jnp.dot(h1, w2, preferred_element_type=jnp.float32) + b2, 0.0)
    mean_w = jnp.tanh(jnp.dot(h2, w3, preferred_element_type=jnp.float32) + b3)

    # Everything below runs on the real action lanes only.
    mean = mean_w[:, 0:output_dim]                    # (bb, D)
    scale = p_ref[3:4, 0:output_dim]
    bias = p_ref[4:5, 0:output_dim]
    std = p_ref[5:6, 0:output_dim]                    # exp(logstd), precomputed
    lp_const = p_ref[6:7, 0:output_dim]               # -logstd - 0.5*log(2*pi)

    se = noise * eps_ref[...]                         # (bb, D)
    raw = mean + std * se                             # action_raw
    y = jnp.tanh(raw)                                 # action_squashed

    # Normal(mean, std).log_prob(raw) = -0.5*(noise*eps)^2 - logstd - 0.5*log(2pi)
    # plus the tanh-squash correction -log(1 - y^2 + 1e-6), summed over lanes.
    lp_elem = -0.5 * se * se + lp_const - jnp.log(1.0 - y * y + 1e-6)
    lp_ref[...] = jnp.sum(lp_elem, axis=1, keepdims=True)

    act_ref[...] = y * scale + bias


def pack_params(params, input_dim, hidden_dim, output_dim):
    """Pack the 9 small parameter tensors into 2 lane-aligned slabs (done once)."""
    ip = _round_up(input_dim, 8)
    wp = _round_up(max(hidden_dim, output_dim), 128)

    def pad2(a, rows, cols):
        a = jnp.asarray(a, jnp.float32)
        return jnp.pad(a, ((0, rows - a.shape[0]), (0, cols - a.shape[1])))

    # w2/w3 padded to wp rows so the chained matmuls always contract over wp
    # (fixes the wp > hidden-pad edge case; padded rows multiply zero lanes).
    w_slab = jnp.concatenate([
        pad2(params["w1"], ip, wp),
        pad2(params["w2"], wp, wp),
        pad2(params["w3"], wp, wp),
    ], axis=0)                                        # (ip + 2*wp, wp)

    logstd = jnp.asarray(params["logstd"], jnp.float32)
    p_slab = jnp.concatenate([
        pad2(params["b1"], 1, wp),
        pad2(params["b2"], 1, wp),
        pad2(params["b3"], 1, wp),
        pad2(params["action_scale"], 1, wp),
        pad2(params["action_bias"], 1, wp),
        pad2(jnp.exp(logstd), 1, wp),                 # std
        pad2(-logstd - _HALF_LOG_2PI, 1, wp),         # log-prob constant
        jnp.zeros((1, wp), jnp.float32),              # pad to 8 sublanes
    ], axis=0)                                        # (8, wp)

    meta = {"input_dim": input_dim, "hidden_dim": hidden_dim,
            "output_dim": output_dim, "ip": ip, "wp": wp}
    return w_slab, p_slab, meta


def actor_forward(x, epsilon, w_slab, p_slab, meta, eval=False, block_b=None):
    """Returns (action (B, D_out), log_prob (B,)) — same semantics as the nn.Module."""
    B = x.shape[0]
    input_dim = meta["input_dim"]
    output_dim = meta["output_dim"]
    ip, wp = meta["ip"], meta["wp"]

    if block_b is None:
        # ~1K rows/step amortizes the ~0.35us per-step overhead; cap so that
        # num_blocks >= 2 whenever possible (v7x has 2 TensorCores that shard
        # the "parallel" batch axis).
        block_b = min(1024, max(8, _round_up((B + 1) // 2, 8)))
    block_b = max(8, _round_up(min(block_b, max(B, 8)), 8))

    # Pad the batch up to a multiple of block_b (zero rows, sliced off after);
    # never fall back to one giant block.
    B_pad = _round_up(B, block_b)
    if B_pad != B:
        x = jnp.pad(x, ((0, B_pad - B), (0, 0)))
        epsilon = jnp.pad(epsilon, ((0, B_pad - B), (0, 0)))
    num_blocks = B_pad // block_b

    # eval flag as data (SMEM scalar) -> one compiled kernel for both modes.
    noise_flag = jnp.array([0 if eval else 1], dtype=jnp.int32)

    kernel = functools.partial(
        actor_kernel, input_dim=input_dim, ip=ip, wp=wp, output_dim=output_dim)

    w_rows = ip + 2 * wp

    grid_spec = pltpu.PrefetchScalarGridSpec(
        num_scalar_prefetch=1,
        grid=(num_blocks,),
        in_specs=[
            pl.BlockSpec((block_b, input_dim), lambda i, n: (i, 0)),   # x (natural width)
            pl.BlockSpec((w_rows, wp), lambda i, n: (0, 0)),           # weight slab (VMEM-resident)
            pl.BlockSpec((8, wp), lambda i, n: (0, 0)),                # bias/scale/std/const rows
            pl.BlockSpec((block_b, output_dim), lambda i, n: (i, 0)),  # epsilon (natural width)
        ],
        out_specs=[
            pl.BlockSpec((block_b, output_dim), lambda i, n: (i, 0)),  # action
            pl.BlockSpec((block_b, 1), lambda i, n: (i, 0)),           # log_prob
        ],
    )

    action, log_prob = pl.pallas_call(
        kernel,
        out_shape=(jax.ShapeDtypeStruct((B_pad, output_dim), jnp.float32),
                   jax.ShapeDtypeStruct((B_pad, 1), jnp.float32)),
        grid_spec=grid_spec,
        compiler_params=pltpu.CompilerParams(
            dimension_semantics=("parallel",)),     # batch axis shards across TCs (v7x)
    )(noise_flag, x, w_slab, p_slab, epsilon)

    return action[:B], log_prob[:B, 0]


def init_params(key, input_dim, hidden_dim, output_dim):
    """Deterministic init mimicking PyTorch nn.Linear default (uniform +-1/sqrt(fan_in))."""
    ks = jax.random.split(key, 6)

    def linear(kw, kb, fan_in, fan_out):
        bound = 1.0 / math.sqrt(fan_in)
        w = jax.random.uniform(kw, (fan_in, fan_out), jnp.float32, -bound, bound)
        b = jax.random.uniform(kb, (1, fan_out), jnp.float32, -bound, bound)
        return w, b

    w1, b1 = linear(ks[0], ks[1], input_dim, hidden_dim)
    w2, b2 = linear(ks[2], ks[3], hidden_dim, hidden_dim)
    w3, b3 = linear(ks[4], ks[5], hidden_dim, output_dim)

    return {
        "w1": w1, "b1": b1,
        "w2": w2, "b2": b2,
        "w3": w3, "b3": b3,
        "logstd": jnp.zeros((1, output_dim), jnp.float32),
        # deterministic synthetic action range: scale=2.0, bias=0.5
        "action_scale": jnp.full((1, output_dim), 2.0, jnp.float32),
        "action_bias": jnp.full((1, output_dim), 0.5, jnp.float32),
    }


def actor_reference(x, params, epsilon, eval=False):
    """Pure-JAX reference matching the PyTorch forward exactly."""
    h1 = jnp.maximum(x @ params["w1"] + params["b1"], 0.0)
    h2 = jnp.maximum(h1 @ params["w2"] + params["b2"], 0.0)
    mean = jnp.tanh(h2 @ params["w3"] + params["b3"])
    logstd = params["logstd"]
    std = jnp.exp(logstd)
    coeff = 0.0 if eval else 1.0
    raw = mean + coeff * std * epsilon
    y = jnp.tanh(raw)
    diff = raw - mean
    lp = -(diff * diff) / (2.0 * std * std) - logstd - _HALF_LOG_2PI
    raw_lp = jnp.sum(lp, axis=1)
    corr = jnp.sum(jnp.log(1.0 - y * y + 1e-6), axis=1)
    action = y * params["action_scale"] + params["action_bias"]
    return action, raw_lp - corr


if __name__ == "__main__":
    batch = 8
    input_dim = 16
    hidden_dim = 32
    output_dim = 4

    key = jax.random.PRNGKey(0)
    k_params, k_x, k_eps = jax.random.split(key, 3)

    params = init_params(k_params, input_dim, hidden_dim, output_dim)
    w_slab, p_slab, meta = pack_params(params, input_dim, hidden_dim, output_dim)

    x = jax.random.normal(k_x, (batch, input_dim), jnp.float32)
    # torch.randn_like equivalent, made deterministic via PRNGKey.
    # TODO(synk): optionally generate epsilon in-kernel via pltpu.prng_seed +
    # pltpu.stateful_normal to remove the noise HBM stream entirely (not
    # bit-identical to an externally supplied epsilon, so kept explicit here).
    epsilon = jax.random.normal(k_eps, (batch, output_dim), jnp.float32)

    for ev in (False, True):
        action, log_prob = actor_forward(x, epsilon, w_slab, p_slab, meta, eval=ev)
        jax.block_until_ready(action)
        jax.block_until_ready(log_prob)

        assert action.shape == (batch, output_dim)
        assert log_prob.shape == (batch,)

        a_ref, lp_ref = actor_reference(x, params, epsilon, eval=ev)
        assert jnp.allclose(action, a_ref, atol=5e-3, rtol=1e-3), (
            "action mismatch", float(jnp.max(jnp.abs(action - a_ref))))
        assert jnp.allclose(log_prob, lp_ref, atol=5e-3, rtol=1e-3), (
            "log_prob mismatch", float(jnp.max(jnp.abs(log_prob - lp_ref))))

    print("KERNEL_OK")
</pallas_src>

<mosaic_0001>
module attributes {stable_mosaic.version = 11 : i64} {
  func.func @actor_kernel(%arg0: i32, %arg1: memref<1xi32, #tpu.memory_space<smem>>, %arg2: memref<8x16xf32, #tpu.memory_space<vmem>>, %arg3: memref<272x128xf32, #tpu.memory_space<vmem>>, %arg4: memref<8x128xf32, #tpu.memory_space<vmem>>, %arg5: memref<8x4xf32, #tpu.memory_space<vmem>>, %arg6: memref<8x4xf32, #tpu.memory_space<vmem>>, %arg7: memref<8x1xf32, #tpu.memory_space<vmem>>) attributes {dimension_semantics = [#tpu.dimension_semantics<parallel>], iteration_bounds = array<i64: 1>, scalar_prefetch = 1 : i64, scratch_operands = 0 : i64, tpu.core_type = #tpu.core_type<tc>, window_params = [{transform_indices = @transform_0, window_bounds = array<i64: 8, 16>}, {pipeline_mode = #tpu.pipeline_mode<synchronous>, transform_indices = @transform_1, window_bounds = array<i64: 272, 128>}, {pipeline_mode = #tpu.pipeline_mode<synchronous>, transform_indices = @transform_2, window_bounds = array<i64: 8, 128>}, {transform_indices = @transform_3, window_bounds = array<i64: 8, 4>}, {transform_indices = @transform_4, window_bounds = array<i64: 8, 4>}, {transform_indices = @transform_5, window_bounds = array<i64: 8, 1>}]} {
    %c0 = arith.constant 0 : index
    %0 = memref.load %arg1[%c0] : memref<1xi32, #tpu.memory_space<smem>>
    %1 = arith.sitofp %0 : i32 to f32
    %c0_0 = arith.constant 0 : index
    %c0_1 = arith.constant 0 : index
    %2 = vector.load %arg2[%c0_0, %c0_1] : memref<8x16xf32, #tpu.memory_space<vmem>>, vector<8x16xf32>
    %c0_2 = arith.constant 0 : index
    %c0_3 = arith.constant 0 : index
    %3 = vector.load %arg3[%c0_2, %c0_3] : memref<272x128xf32, #tpu.memory_space<vmem>>, vector<16x128xf32>
    %c16 = arith.constant 16 : index
    %c0_4 = arith.constant 0 : index
    %4 = vector.load %arg3[%c16, %c0_4] : memref<272x128xf32, #tpu.memory_space<vmem>>, vector<128x128xf32>
    %c144 = arith.constant 144 : index
    %c0_5 = arith.constant 0 : index
    %5 = vector.load %arg3[%c144, %c0_5] : memref<272x128xf32, #tpu.memory_space<vmem>>, vector<128x128xf32>
    %c0_6 = arith.constant 0 : index
    %c0_7 = arith.constant 0 : index
    %6 = vector.load %arg4[%c0_6, %c0_7] : memref<8x128xf32, #tpu.memory_space<vmem>>, vector<1x128xf32>
    %c1 = arith.constant 1 : index
    %c0_8 = arith.constant 0 : index
    %7 = vector.load %arg4[%c1, %c0_8] : memref<8x128xf32, #tpu.memory_space<vmem>>, vector<1x128xf32>
    %c2 = arith.constant 2 : index
    %c0_9 = arith.constant 0 : index
    %8 = vector.load %arg4[%c2, %c0_9] : memref<8x128xf32, #tpu.memory_space<vmem>>, vector<1x128xf32>
    %cst = arith.constant dense<0.000000e+00> : vector<8x128xf32>
    %9 = tpu.matmul %2, %3, %cst {dimension_numbers = #tpu.dot_dimension_numbers<[1], [0], [0], [1], [0, 0, 1, 1], [], []>} : vector<8x16xf32>, vector<16x128xf32>, vector<8x128xf32> -> vector<8x128xf32>
    %10 = vector.broadcast %6 : vector<1x128xf32> to vector<8x128xf32>
    %11 = arith.addf %9, %10 : vector<8x128xf32>
    %cst_10 = arith.constant 0.000000e+00 : f32
    %12 = vector.broadcast %cst_10 : f32 to vector<8x128xf32>
    %13 = arith.maximumf %11, %12 : vector<8x128xf32>
    %cst_11 = arith.constant dense<0.000000e+00> : vector<8x128xf32>
    %14 = tpu.matmul %13, %4, %cst_11 {dimension_numbers = #tpu.dot_dimension_numbers<[1], [0], [0], [1], [0, 0, 1, 1], [], []>} : vector<8x128xf32>, vector<128x128xf32>, vector<8x128xf32> -> vector<8x128xf32>
    %15 = vector.broadcast %7 : vector<1x128xf32> to vector<8x128xf32>
    %16 = arith.addf %14, %15 : vector<8x128xf32>
    %cst_12 = arith.constant 0.000000e+00 : f32
    %17 = vector.broadcast %cst_12 : f32 to vector<8x128xf32>
    %18 = arith.maximumf %16, %17 : vector<8x128xf32>
    %cst_13 = arith.constant dense<0.000000e+00> : vector<8x128xf32>
    %19 = tpu.matmul %18, %5, %cst_13 {dimension_numbers = #tpu.dot_dimension_numbers<[1], [0], [0], [1], [0, 0, 1, 1], [], []>} : vector<8x128xf32>, vector<128x128xf32>, vector<8x128xf32> -> vector<8x128xf32>
    %20 = vector.broadcast %8 : vector<1x128xf32> to vector<8x128xf32>
    %21 = arith.addf %19, %20 : vector<8x128xf32>
    %22 = math.tanh %21 : vector<8x128xf32>
    %23 = vector.extract_strided_slice %22 {offsets = [0, 0], sizes = [8, 4], strides = [1, 1]} : vector<8x128xf32> to vector<8x4xf32>
    %c3 = arith.constant 3 : index
    %c0_14 = arith.constant 0 : index
    %24 = vector.load %arg4[%c3, %c0_14] : memref<8x128xf32, #tpu.memory_space<vmem>>, vector<1x4xf32>
    %c4 = arith.constant 4 : index
    %c0_15 = arith.constant 0 : index
    %25 = vector.load %arg4[%c4, %c0_15] : memref<8x128xf32, #tpu.memory_space<vmem>>, vector<1x4xf32>
    %c5 = arith.constant 5 : index
    %c0_16 = arith.constant 0 : index
    %26 = vector.load %arg4[%c5, %c0_16] : memref<8x128xf32, #tpu.memory_space<vmem>>, vector<1x4xf32>
    %c6 = arith.constant 6 : index
    %c0_17 = arith.constant 0 : index
    %27 = vector.load %arg4[%c6, %c0_17] : memref<8x128xf32, #tpu.memory_space<vmem>>, vector<1x4xf32>
    %c0_18 = arith.constant 0 : index
    %c0_19 = arith.constant 0 : index
    %28 = vector.load %arg5[%c0_18, %c0_19] : memref<8x4xf32, #tpu.memory_space<vmem>>, vector<8x4xf32>
    %29 = vector.broadcast %1 : f32 to vector<8x4xf32>
    %30 = arith.mulf %29, %28 : vector<8x4xf32>
    %31 = vector.broadcast %26 : vector<1x4xf32> to vector<8x4xf32>
    %32 = arith.mulf %31, %30 : vector<8x4xf32>
    %33 = arith.addf %23, %32 : vector<8x4xf32>
    %34 = math.tanh %33 : vector<8x4xf32>
    %cst_20 = arith.constant -5.000000e-01 : f32
    %35 = vector.broadcast %cst_20 : f32 to vector<8x4xf32>
    %36 = arith.mulf %35, %30 : vector<8x4xf32>
    %37 = arith.mulf %36, %30 : vector<8x4xf32>
    %38 = vector.broadcast %27 : vector<1x4xf32> to vector<8x4xf32>
    %39 = arith.addf %37, %38 : vector<8x4xf32>
    %40 = arith.mulf %34, %34 : vector<8x4xf32>
    %cst_21 = arith.constant 1.000000e+00 : f32
    %41 = vector.broadcast %cst_21 : f32 to vector<8x4xf32>
    %42 = arith.subf %41, %40 : vector<8x4xf32>
    %cst_22 = arith.constant 9.99999997E-7 : f32
    %43 = vector.broadcast %cst_22 : f32 to vector<8x4xf32>
    %44 = arith.addf %42, %43 : vector<8x4xf32>
    %45 = math.log %44 : vector<8x4xf32>
    %46 = arith.subf %39, %45 : vector<8x4xf32>
    %cst_23 = arith.constant dense<0.000000e+00> : vector<8xf32>
    %47 = vector.multi_reduction <add>, %46, %cst_23 [1] : vector<8x4xf32> to vector<8xf32>
    %48 = vector.shape_cast %47 : vector<8xf32> to vector<8x1xf32>
    %c0_24 = arith.constant 0 : index
    %c0_25 = arith.constant 0 : index
    %49 = vector.load %arg7[%c0_24, %c0_25] : memref<8x1xf32, #tpu.memory_space<vmem>>, vector<8x1xf32>
    tpu.vector_store %arg7[%c0_24, %c0_25], %48 {strides = array<i32>} : memref<8x1xf32, #tpu.memory_space<vmem>>, vector<8x1xf32>,
    %50 = vector.broadcast %24 : vector<1x4xf32> to vector<8x4xf32>
    %51 = arith.mulf %34, %50 : vector<8x4xf32>
    %52 = vector.broadcast %25 : vector<1x4xf32> to vector<8x4xf32>
    %53 = arith.addf %51, %52 : vector<8x4xf32>
    %c0_26 = arith.constant 0 : index
    %c0_27 = arith.constant 0 : index
    %54 = vector.load %arg6[%c0_26, %c0_27] : memref<8x4xf32, #tpu.memory_space<vmem>>, vector<8x4xf32>
    tpu.vector_store %arg6[%c0_26, %c0_27], %53 {strides = array<i32>} : memref<8x4xf32, #tpu.memory_space<vmem>>, vector<8x4xf32>,
    return
  }
  func.func @transform_0(%arg0: i32, %arg1: memref<1xi32, #tpu.memory_space<smem>>) -> (i32, i32) {
    %c0_i32 = arith.constant 0 : i32
    %c0_i32_0 = arith.constant 0 : i32
    return %arg0, %c0_i32 : i32, i32
  }
  func.func @transform_1(%arg0: i32, %arg1: memref<1xi32, #tpu.memory_space<smem>>) -> (i32, i32) {
    %c0_i32 = arith.constant 0 : i32
    %c0_i32_0 = arith.constant 0 : i32
    %c0_i32_1 = arith.constant 0 : i32
    return %c0_i32, %c0_i32_0 : i32, i32
  }
  func.func @transform_2(%arg0: i32, %arg1: memref<1xi32, #tpu.memory_space<smem>>) -> (i32, i32) {
    %c0_i32 = arith.constant 0 : i32
    %c0_i32_0 = arith.constant 0 : i32
    %c0_i32_1 = arith.constant 0 : i32
    return %c0_i32, %c0_i32_0 : i32, i32
  }
  func.func @transform_3(%arg0: i32, %arg1: memref<1xi32, #tpu.memory_space<smem>>) -> (i32, i32) {
    %c0_i32 = arith.constant 0 : i32
    %c0_i32_0 = arith.constant 0 : i32
    return %arg0, %c0_i32 : i32, i32
  }
  func.func @transform_4(%arg0: i32, %arg1: memref<1xi32, #tpu.memory_space<smem>>) -> (i32, i32) {
    %c0_i32 = arith.constant 0 : i32
    %c0_i32_0 = arith.constant 0 : i32
    return %arg0, %c0_i32 : i32, i32
  }
  func.func @transform_5(%arg0: i32, %arg1: memref<1xi32, #tpu.memory_space<smem>>) -> (i32, i32) {
    %c0_i32 = arith.constant 0 : i32
    %c0_i32_0 = arith.constant 0 : i32
    return %arg0, %c0_i32 : i32, i32
  }
}

</mosaic_0001>

<llo_original>
// kernel: tpu_custom_call.1
$region0: #{tpu_custom_call.1}
  #allocation0 [shape = 'u32[]', space=smem, size = 0x4, offset = 0x4, fixed_abs, tag = 'smem constant byte address 0x4 - core index']
  #allocation1 [shape = 'u32[144,128]{1,0:T(1,128)}', space=vmem, size = 0x12000, scoped, tag = 'internal scratch']
  #allocation2 [shape = 's32[1]{0}', space=sflag, size = 0x4, scoped, tag = 'scoped memory for tpu_custom_call.1']
  #allocation3 [shape = 's32[1]{0:T(128)S(6)}', space=smem, size = 0x200, scoped, tag = 'prefetched SMEM operand 0']
  %s0 = inlined_call_operand.<no memory space> [shape: s32[1], index: 0, kind: input, shape index: {}]
  %s1 = inlined_call_operand.vmem [shape: f32[8,16], index: 1, kind: input, shape index: {}]
  %s2 = inlined_call_operand.hbm [shape: f32[272,128], index: 2, kind: input, shape index: {}]
  %s3 = inlined_call_operand.vmem [shape: f32[8,128], index: 3, kind: input, shape index: {}]
  %s4 = inlined_call_operand.vmem [shape: f32[8,4], index: 4, kind: input, shape index: {}]
  %s5 = inlined_call_operand.vmem [shape: f32[8,4], index: 5, kind: output, shape index: {0}]
  %s6 = inlined_call_operand.vmem [shape: f32[8,1], index: 6, kind: output, shape index: {1}]
  %7 = xla_tuple %s5, %s6
  %s8 = sld [smem:[#allocation0]]
  $region38: #{tpu_custom_call.1} parent=0
    _
  %s10 = ssub.s32 1, %s8
  %s11 = scalar_select 0, %s10, %s8
  %12 = sst [smem:[#allocation3]] %s0
  $region1: #{tpu_custom_call.1} parent=0
    #allocation4 [shape = 'u8[139264]{0}', space=vmem, size = 0x22000, scoped, tag = 'input window, operand 2, single buffered']
    #allocation5 [shape = 's32[1]{0}', space=sflag, size = 0x4, scoped, tag = 'scoped memory for tpu_custom_call.1']
    %13 = vsyncpa [#allocation5], 0
    // Predicated region
    $region2: #{tpu_custom_call.1} parent=1 // pred_check
      _
    $region3: #{tpu_custom_call.1} parent=1 // pred_check_branch
      %15 = sbr.rel (0) target = $region5
    $region4: #{tpu_custom_call.1} parent=1 // pred_region
      _
    $region5: #{tpu_custom_call.1} parent=1 // pred_fallthru
      _
    // Predicated region
    $region6: #{tpu_custom_call.1} parent=1 // pred_check
      _
    $region7: #{tpu_custom_call.1} parent=1 // pred_check_branch
      %17 = sbr.rel (0) target = $region9
    $region8: #{tpu_custom_call.1} parent=1 // pred_region
      %s19 = ssub.s32 4352, 4352
      %20 = vsyncadd [#allocation5], %s19
      %s21 = sshll.u32 [#allocation4], 4
      %s22 = int_to_ptr.vmem [resolvable:$true] %s21
      %27 = dma.hbm_to_vmem [thread:$0]  %s2, 4352, %s22, [#allocation5], 128, 128, 8
    $region9: #{tpu_custom_call.1} parent=1 // pred_fallthru
      _
    // Predicated region
    $region10: #{tpu_custom_call.1} parent=1 // pred_check
      _
    $region11: #{tpu_custom_call.1} parent=1 // pred_check_branch
      %29 = sbr.rel (0) target = $region13
    $region12: #{tpu_custom_call.1} parent=1 // pred_region
      _
    $region13: #{tpu_custom_call.1} parent=1 // pred_fallthru
      _
    // Predicated region
    $region14: #{tpu_custom_call.1} parent=1 // pred_check
      _
    $region15: #{tpu_custom_call.1} parent=1 // pred_check_branch
      %31 = sbr.rel (0) target = $region17
    $region16: #{tpu_custom_call.1} parent=1 // pred_region
      _
    $region17: #{tpu_custom_call.1} parent=1 // pred_fallthru
      _
    // Predicated region
    $region18: #{tpu_custom_call.1} parent=1 // pred_check
      _
    $region19: #{tpu_custom_call.1} parent=1 // pred_check_branch
      %33 = sbr.rel (0) target = $region21
    $region20: #{tpu_custom_call.1} parent=1 // pred_region
      %34 = dma.done [#allocation5], 4352
    $region21: #{tpu_custom_call.1} parent=1 // pred_fallthru
      _
    %s35 = sld [smem:[#allocation3]]
    %s36 = scvt.s32.f32 %s35
    %v37 = vld [vmem:[%s1] sm:$0xff]
    %v38 = vld [vmem:[#allocation4] sm:$0xff]
    %v39 = vld [vmem:[#allocation4 + $0x8] sm:$0xff]
    %v40 = vld [vmem:[#allocation4 + $0x10] sm:$0xff]
    %v41 = vld [vmem:[#allocation4 + $0x18] sm:$0xff]
    %v42 = vld [vmem:[#allocation4 + $0x20] sm:$0xff]
    %v43 = vld [vmem:[#allocation4 + $0x28] sm:$0xff]
    %v44 = vld [vmem:[#allocation4 + $0x30] sm:$0xff]
    %v45 = vld [vmem:[#allocation4 + $0x38] sm:$0xff]
    %v46 = vld [vmem:[#allocation4 + $0x40] sm:$0xff]
    %v47 = vld [vmem:[#allocation4 + $0x48] sm:$0xff]
    %v48 = vld [vmem:[#allocation4 + $0x50] sm:$0xff]
    %v49 = vld [vmem:[#allocation4 + $0x58] sm:$0xff]
    %v50 = vld [vmem:[#allocation4 + $0x60] sm:$0xff]
    %v51 = vld [vmem:[#allocation4 + $0x68] sm:$0xff]
    %v52 = vld [vmem:[#allocation4 + $0x70] sm:$0xff]
    %v53 = vld [vmem:[#allocation4 + $0x78] sm:$0xff]
    %v54 = vld [vmem:[#allocation4 + $0x80] sm:$0xff]
    %v55 = vld [vmem:[#allocation4 + $0x88] sm:$0xff]
    %v56 = vld [vmem:[#allocation4 + $0x90] sm:$0xff]
    %v57 = vld [vmem:[#allocation4 + $0x98] sm:$0xff]
    %v58 = vld [vmem:[#allocation4 + $0xa0] sm:$0xff]
    %v59 = vld [vmem:[#allocation4 + $0xa8] sm:$0xff]
    %v60 = vld [vmem:[#allocation4 + $0xb0] sm:$0xff]
    %v61 = vld [vmem:[#allocation4 + $0xb8] sm:$0xff]
    %v62 = vld [vmem:[#allocation4 + $0xc0] sm:$0xff]
    %v63 = vld [vmem:[#allocation4 + $0xc8] sm:$0xff]
    %v64 = vld [vmem:[#allocation4 + $0xd0] sm:$0xff]
    %v65 = vld [vmem:[#allocation4 + $0xd8] sm:$0xff]
    %v66 = vld [vmem:[#allocation4 + $0xe0] sm:$0xff]
    %v67 = vld [vmem:[#allocation4 + $0xe8] sm:$0xff]
    %v68 = vld [vmem:[#allocation4 + $0xf0] sm:$0xff]
    %v69 = vld [vmem:[#allocation4 + $0xf8] sm:$0xff]
    %v70 = vld [vmem:[#allocation4 + $0x100] sm:$0xff]
    %v71 = vld [vmem:[#allocation4 + $0x108] sm:$0xff]
    %v72 = vld [vmem:[%s3] sm:$0x1]
    %v73 = vld [vmem:[%s3 + $0x1] sm:$0x1]
    %v74 = vld [vmem:[%s3 + $0x2] sm:$0x1]
    %v75 = vlaneseq
    %v76 = vshrl.u32 %v75, 7
    %v77 = vsub.s32 0, %v76
    %v78 = vrot.slane %v72, %v77
    %vm79 = vcmask 130048
    %v81 = vsel %vm79, %v37, 0
    %83 = vmatprep.subr.mxu0 0.0
    %84 = vmatpush1.msra.mxu0 %v38
    %85 = vmatprep.subr.mxu0 0.0
    %86 = vmatpush1.msra.mxu0 %v39
    %87 = vmatprep.subr.mxu0 0.0
    %88 = vmatpush1.msra.mxu0 0.0
    %89 = vmatprep.subr.mxu0 0.0
    %90 = vmatpush1.msra.mxu0 0.0
    %91 = vmatprep.subr.mxu0 0.0
    %92 = vmatpush1.msra.mxu0 0.0
    %93 = vmatprep.subr.mxu0 0.0
    %94 = vmatpush1.msra.mxu0 0.0
    %95 = vmatprep.subr.mxu0 0.0
    %96 = vmatpush1.msra.mxu0 0.0
    %97 = vmatprep.subr.mxu0 0.0
    %98 = vmatpush1.msra.mxu0 0.0
    %99 = vmatprep.subr.mxu0 0.0
    %100 = vmatpush1.msra.mxu0 0.0
    %101 = vmatprep.subr.mxu0 0.0
    %102 = vmatpush1.msra.mxu0 0.0
    %103 = vmatprep.subr.mxu0 0.0
    %104 = vmatpush1.msra.mxu0 0.0
    %105 = vmatprep.subr.mxu0 0.0
    %106 = vmatpush1.msra.mxu0 0.0
    %107 = vmatprep.subr.mxu0 0.0
    %108 = vmatpush1.msra.mxu0 0.0
    %109 = vmatprep.subr.mxu0 0.0
    %110 = vmatpush1.msra.mxu0 0.0
    %111 = vmatprep.subr.mxu0 0.0
    %112 = vmatpush1.msra.mxu0 0.0
    %113 = vmatprep.subr.mxu0 0.0
    %114 = vmatpush1.msra.mxu0 0.0
    %115 = vmatprep.subr.mxu0 0.0
    %116 = vmatpush1.msra.mxu0 0.0
    %117 = vmatprep.subr.mxu0 0.0
    %118 = vmatpush1.msra.mxu0 0.0
    %119 = vmatprep.subr.mxu0 0.0
    %120 = vmatpush1.msra.mxu0 0.0
    %121 = vmatprep.subr.mxu0 0.0
    %122 = vmatpush1.msra.mxu0 0.0
    %123 = vmatprep.subr.mxu0 0.0
    %124 = vmatpush1.msra.mxu0 0.0
    %125 = vmatprep.subr.mxu0 0.0
    %126 = vmatpush1.msra.mxu0 0.0
    %127 = vmatprep.subr.mxu0 0.0
    %128 = vmatpush1.msra.mxu0 0.0
    %129 = vmatprep.subr.mxu0 0.0
    %130 = vmatpush1.msra.mxu0 0.0
    %131 = vmatprep.subr.mxu0 0.0
    %132 = vmatpush1.msra.mxu0 0.0
    %133 = vmatprep.subr.mxu0 0.0
    %134 = vmatpush1.msra.mxu0 0.0
    %135 = vmatprep.subr.mxu0 0.0
    %136 = vmatpush1.msra.mxu0 0.0
    %137 = vmatprep.subr.mxu0 0.0
    %138 = vmatpush1.msra.mxu0 0.0
    %139 = vmatprep.subr.mxu0 0.0
    %140 = vmatpush1.msra.mxu0 0.0
    %141 = vmatprep.subr.mxu0 0.0
    %142 = vmatpush1.msra.mxu0 0.0
    %143 = vmatprep.subr.mxu0 0.0
    %144 = vmatpush1.msra.mxu0 0.0
    %145 = vmatprep.subr.mxu0 0.0
    %146 = vmatpush1.msra.mxu0 0.0
    %147 = vmatprep.mubr.f32.mxu0 0.0
    %148 = vmatmul.mubr.f32.gmra.mrb[0].mxu0 %v81
    %v149 = vpop.f32.mrb[0].mxu0
    %v150 = vadd.f32 %v78, %v149
    %v151 = vpop.f32.mrb[0].mxu0
    %152 = vdwg.mxu0
    %v153 = vmax.f32 %v150, 0.0
    %v154 = vlaneseq
    %v155 = vshrl.u32 %v154, 7
    %v156 = vsub.s32 0, %v155
    %v157 = vrot.slane %v73, %v156
    %158 = vmatprep.subr.mxu0 0.0
    %159 = vmatpush1.msra.mxu0 %v40
    %160 = vmatprep.subr.mxu0 0.0
    %161 = vmatpush1.msra.mxu0 %v41
    %162 = vmatprep.subr.mxu0 0.0
    %163 = vmatpush1.msra.mxu0 %v42
    %164 = vmatprep.subr.mxu0 0.0
    %165 = vmatpush1.msra.mxu0 %v43
    %166 = vmatprep.subr.mxu0 0.0
    %167 = vmatpush1.msra.mxu0 %v44
    %168 = vmatprep.subr.mxu0 0.0
    %169 = vmatpush1.msra.mxu0 %v45
    %170 = vmatprep.subr.mxu0 0.0
    %171 = vmatpush1.msra.mxu0 %v46
    %172 = vmatprep.subr.mxu0 0.0
    %173 = vmatpush1.msra.mxu0 %v47
    %174 = vmatprep.subr.mxu0 0.0
    %175 = vmatpush1.msra.mxu0 %v48
    %176 = vmatprep.subr.mxu0 0.0
    %177 = vmatpush1.msra.mxu0 %v49
    %178 = vmatprep.subr.mxu0 0.0
    %179 = vmatpush1.msra.mxu0 %v50
    %180 = vmatprep.subr.mxu0 0.0
    %181 = vmatpush1.msra.mxu0 %v51
    %182 = vmatprep.subr.mxu0 0.0
    %183 = vmatpush1.msra.mxu0 %v52
    %184 = vmatprep.subr.mxu0 0.0
    %185 = vmatpush1.msra.mxu0 %v53
    %186 = vmatprep.subr.mxu0 0.0
    %187 = vmatpush1.msra.mxu0 %v54
    %188 = vmatprep.subr.mxu0 0.0
    %189 = vmatpush1.msra.mxu0 %v55
    %190 = vmatprep.subr.mxu0 0.0
    %191 = vmatpush1.msra.mxu0 0.0
    %192 = vmatprep.subr.mxu0 0.0
    %193 = vmatpush1.msra.mxu0 0.0
    %194 = vmatprep.subr.mxu0 0.0
    %195 = vmatpush1.msra.mxu0 0.0
    %196 = vmatprep.subr.mxu0 0.0
    %197 = vmatpush1.msra.mxu0 0.0
    %198 = vmatprep.subr.mxu0 0.0
    %199 = vmatpush1.msra.mxu0 0.0
    %200 = vmatprep.subr.mxu0 0.0
    %201 = vmatpush1.msra.mxu0 0.0
    %202 = vmatprep.subr.mxu0 0.0
    %203 = vmatpush1.msra.mxu0 0.0
    %204 = vmatprep.subr.mxu0 0.0
    %205 = vmatpush1.msra.mxu0 0.0
    %206 = vmatprep.subr.mxu0 0.0
    %207 = vmatpush1.msra.mxu0 0.0
    %208 = vmatprep.subr.mxu0 0.0
    %209 = vmatpush1.msra.mxu0 0.0
    %210 = vmatprep.subr.mxu0 0.0
    %211 = vmatpush1.msra.mxu0 0.0
    %212 = vmatprep.subr.mxu0 0.0
    %213 = vmatpush1.msra.mxu0 0.0
    %214 = vmatprep.subr.mxu0 0.0
    %215 = vmatpush1.msra.mxu0 0.0
    %216 = vmatprep.subr.mxu0 0.0
    %217 = vmatpush1.msra.mxu0 0.0
    %218 = vmatprep.subr.mxu0 0.0
    %219 = vmatpush1.msra.mxu0 0.0
    %220 = vmatprep.subr.mxu0 0.0
    %221 = vmatpush1.msra.mxu0 0.0
    %222 = vmatprep.mubr.f32.mxu0 0.0
    %223 = vmatmul.mubr.f32.gmra.mrb[0].mxu0 %v153
    %v224 = vpop.f32.mrb[0].mxu0
    %v225 = vadd.f32 %v157, %v224
    %v226 = vpop.f32.mrb[0].mxu0
    %227 = vdwg.mxu0
    %v228 = vmax.f32 %v225, 0.0
    %v229 = vlaneseq
    %v230 = vshrl.u32 %v229, 7
    %v231 = vsub.s32 0, %v230
    %v232 = vrot.slane %v74, %v231
    %233 = vmatprep.subr.mxu0 0.0
    %234 = vmatpush1.msra.mxu0 %v56
    %235 = vmatprep.subr.mxu0 0.0
    %236 = vmatpush1.msra.mxu0 %v57
    %237 = vmatprep.subr.mxu0 0.0
    %238 = vmatpush1.msra.mxu0 %v58
    %239 = vmatprep.subr.mxu0 0.0
    %240 = vmatpush1.msra.mxu0 %v59
    %241 = vmatprep.subr.mxu0 0.0
    %242 = vmatpush1.msra.mxu0 %v60
    %243 = vmatprep.subr.mxu0 0.0
    %244 = vmatpush1.msra.mxu0 %v61
    %245 = vmatprep.subr.mxu0 0.0
    %246 = vmatpush1.msra.mxu0 %v62
    %247 = vmatprep.subr.mxu0 0.0
    %248 = vmatpush1.msra.mxu0 %v63
    %249 = vmatprep.subr.mxu0 0.0
    %250 = vmatpush1.msra.mxu0 %v64
    %251 = vmatprep.subr.mxu0 0.0
    %252 = vmatpush1.msra.mxu0 %v65
    %253 = vmatprep.subr.mxu0 0.0
    %254 = vmatpush1.msra.mxu0 %v66
    %255 = vmatprep.subr.mxu0 0.0
    %256 = vmatpush1.msra.mxu0 %v67
    %257 = vmatprep.subr.mxu0 0.0
    %258 = vmatpush1.msra.mxu0 %v68
    %259 = vmatprep.subr.mxu0 0.0
    %260 = vmatpush1.msra.mxu0 %v69
    %261 = vmatprep.subr.mxu0 0.0
    %262 = vmatpush1.msra.mxu0 %v70
    %263 = vmatprep.subr.mxu0 0.0
    %264 = vmatpush1.msra.mxu0 %v71
    %265 = vmatprep.subr.mxu0 0.0
    %266 = vmatpush1.msra.mxu0 0.0
    %267 = vmatprep.subr.mxu0 0.0
    %268 = vmatpush1.msra.mxu0 0.0
    %269 = vmatprep.subr.mxu0 0.0
    %270 = vmatpush1.msra.mxu0 0.0
    %271 = vmatprep.subr.mxu0 0.0
    %272 = vmatpush1.msra.mxu0 0.0
    %273 = vmatprep.subr.mxu0 0.0
    %274 = vmatpush1.msra.mxu0 0.0
    %275 = vmatprep.subr.mxu0 0.0
    %276 = vmatpush1.msra.mxu0 0.0
    %277 = vmatprep.subr.mxu0 0.0
    %278 = vmatpush1.msra.mxu0 0.0
    %279 = vmatprep.subr.mxu0 0.0
    %280 = vmatpush1.msra.mxu0 0.0
    %281 = vmatprep.subr.mxu0 0.0
    %282 = vmatpush1.msra.mxu0 0.0
    %283 = vmatprep.subr.mxu0 0.0
    %284 = vmatpush1.msra.mxu0 0.0
    %285 = vmatprep.subr.mxu0 0.0
    %286 = vmatpush1.msra.mxu0 0.0
    %287 = vmatprep.subr.mxu0 0.0
    %288 = vmatpush1.msra.mxu0 0.0
    %289 = vmatprep.subr.mxu0 0.0
    %290 = vmatpush1.msra.mxu0 0.0
    %291 = vmatprep.subr.mxu0 0.0
    %292 = vmatpush1.msra.mxu0 0.0
    %293 = vmatprep.subr.mxu0 0.0
    %294 = vmatpush1.msra.mxu0 0.0
    %295 = vmatprep.subr.mxu0 0.0
    %296 = vmatpush1.msra.mxu0 0.0
    %297 = vmatprep.mubr.f32.mxu0 0.0
    %298 = vmatmul.mubr.f32.gmra.mrb[0].mxu0 %v228
    %v299 = vpop.f32.mrb[0].mxu0
    %v300 = vadd.f32 %v232, %v299
    %v301 = vpop.f32.mrb[0].mxu0
    %302 = vdwg.mxu0
    %v303 = vtanh.pop %v300
    %v304 = vld [vmem:[%s3 + $0x3] sm:$0x1]
    %v305 = vld [vmem:[%s3 + $0x4] sm:$0x1]
    %v306 = vld [vmem:[%s3 + $0x5] sm:$0x1]
    %v307 = vld [vmem:[%s3 + $0x6] sm:$0x1]
    %v308 = vld [vmem:[%s4] sm:$0xff]
    %v309 = vstv %s36
    %v310 = vmul.f32 %v309, %v308
    %v311 = vlaneseq
    %v312 = vshrl.u32 %v311, 7
    %v313 = vsub.s32 0, %v312
    %v314 = vrot.slane %v306, %v313
    %v315 = vmul.f32 %v314, %v310
    %v316 = vadd.f32 %v303, %v315
    %v317 = vtanh.pop %v316
    %v318 = vmul.f32 %v310, -0.5
    %v319 = vmul.f32 %v318, %v310
    %v320 = vlaneseq
    %v321 = vshrl.u32 %v320, 7
    %v322 = vsub.s32 0, %v321
    %v323 = vrot.slane %v307, %v322
    %v324 = vadd.f32 %v319, %v323
    %v325 = vmul.f32 %v317, %v317
    %v326 = vsub.f32 1.0, %v325
    %v327 = vadd.f32 %v326, 1e-06
    %v328 = vlog2.pop %v327
    %v329 = vmul.f32 %v328, 0.6931472
    %v330 = vsub.f32 %v324, %v329
    %vm331 = vcmask 31744
    %v332 = vsel %vm331, %v330, 0.0
    %333 = vadd.xlane.f32.xlu0 %v332
    %v334 = vpop.xlane.xlu0 %333
    %vm335 = vcmask 7168
    %336 = vst.msk [vmem:[%s6] sm:$0xff] %vm335, %v334
    %v337 = vlaneseq
    %v338 = vshrl.u32 %v337, 7
    %v339 = vsub.s32 0, %v338
    %v340 = vrot.slane %v304, %v339
    %v341 = vmul.f32 %v317, %v340
    %v342 = vlaneseq
    %v343 = vshrl.u32 %v342, 7
    %v344 = vsub.s32 0, %v343
    %v345 = vrot.slane %v305, %v344
    %v346 = vadd.f32 %v341, %v345
    %347 = vst.msk [vmem:[%s5] sm:$0xff] %vm331, %v346
    // Predicated region
    $region22: #{tpu_custom_call.1} parent=1 // pred_check
      _
    $region23: #{tpu_custom_call.1} parent=1 // pred_check_branch
      %349 = sbr.rel (0) target = $region25
    $region24: #{tpu_custom_call.1} parent=1 // pred_region
      _
    $region25: #{tpu_custom_call.1} parent=1 // pred_fallthru
      _
    // Predicated region
    $region26: #{tpu_custom_call.1} parent=1 // pred_check
      _
    $region27: #{tpu_custom_call.1} parent=1 // pred_check_branch
      %351 = sbr.rel (0) target = $region29
    $region28: #{tpu_custom_call.1} parent=1 // pred_region
      _
    $region29: #{tpu_custom_call.1} parent=1 // pred_fallthru
      _
    // Predicated region
    $region30: #{tpu_custom_call.1} parent=1 // pred_check
      _
    $region31: #{tpu_custom_call.1} parent=1 // pred_check_branch
      %353 = sbr.rel (0) target = $region33
    $region32: #{tpu_custom_call.1} parent=1 // pred_region
      _
    $region33: #{tpu_custom_call.1} parent=1 // pred_fallthru
      _
    // Predicated region
    $region34: #{tpu_custom_call.1} parent=1 // pred_check
      _
    $region35: #{tpu_custom_call.1} parent=1 // pred_check_branch
      %355 = sbr.rel (0) target = $region37
    $region36: #{tpu_custom_call.1} parent=1 // pred_region
      _
    $region37: #{tpu_custom_call.1} parent=1 // pred_fallthru
      _
    %356 = vsyncpa [#allocation5], 1

</llo_original>
